<compile_context>
chip_gen: v5e
topology: v5e:2x2
jax: 0.10.0
libtpu: 0.0.40
codegen_flags: <defaults>
</compile_context>

<pallas_src>
import functools

import jax
import jax.numpy as jnp
from jax import lax
from jax.experimental import pallas as pl
from jax.experimental.pallas import tpu as pltpu


def mlp_kernel(x_ref, w12_ref, b12_ref, w3_ref, b3_ref, o_ref):
    x = x_ref[...]                                    # (9, TB) f32, batch on lanes
    w12 = w12_ref[...]                                # (7, 9)
    w3 = w3_ref[...]                                  # (5, 7)
    tb = x.shape[1]                                   # static block lane width

    # Fused Linear(9->7) o Linear(7->7):  h = W12 @ x + b12.
    # Unrolled rank-1 broadcast multiply-adds on the VPU: with M=7, K=9 the
    # MXU would run at <1% utilization and its push cadence would cap
    # throughput at large tiles.
    h = jnp.broadcast_to(b12_ref[...], (7, tb))
    for k in range(9):
        h = h + w12[:, k:k + 1] * x[k:k + 1, :]

    # LeakyReLU(negative_slope=0.2)
    h = jnp.where(h >= 0.0, h, 0.2 * h)

    # Linear(7->5):  y = W3 @ h + b3, then ReLU.
    y = jnp.broadcast_to(b3_ref[...], (5, tb))
    for k in range(7):
        y = y + w3[:, k:k + 1] * h[k:k + 1, :]

    o_ref[...] = jnp.maximum(y, 0.0).astype(o_ref.dtype)


def _round_up(n, m):
    return ((n + m - 1) // m) * m


def _choose_tb(batch, tb_max):
    """Batch-tile (lane) width.

    * batch <= 128: single full-array block (lane dim == array dim is legal).
    * otherwise: multiples of 128, aiming for >=4 grid steps (pipelining +
      v7x megacore sharding), capped by tb_max (VMEM budget).
    """
    if batch <= 128:
        return batch
    target = _round_up(pl.cdiv(batch, 4), 128)
    return max(128, min(tb_max, target))


@functools.partial(jax.jit, static_argnames=("tb_max",))
def neural_network_forward_feature_major(xT, params, *, tb_max=65536):
    """Feature-major forward: xT (9, B) float32 -> (5, B) float32.

    No wrapper-side transposes/padding; use this when producer/consumer can
    work feature-major. tb_max: 65536 works on all generations with the
    48MiB vmem limit below; on v7x it can be pushed toward 131072.
    """
    B = xT.shape[1]
    w1, b1 = params["w1"], params["b1"]
    w2, b2 = params["w2"], params["b2"]
    w3, b3 = params["w3"], params["b3"]

    hi = lax.Precision.HIGHEST
    # Exact algebraic fusion of the first two linears (no activation between):
    #   Linear2(Linear1(x)) = (W2 @ W1) x + (W2 b1 + b2)
    w12 = jnp.dot(w2, w1, precision=hi).astype(jnp.float32)                    # (7, 9)
    b12 = (jnp.dot(w2, b1, precision=hi) + b2).reshape(7, 1).astype(jnp.float32)
    w3f = w3.astype(jnp.float32)                                               # (5, 7)
    b3f = b3.reshape(5, 1).astype(jnp.float32)                                 # (5, 1)

    xT = xT.astype(jnp.float32)
    tb = _choose_tb(B, tb_max)
    grid = (pl.cdiv(B, tb),)

    const = lambda i: (0, 0)
    cost = pl.CostEstimate(
        flops=222 * B,                                    # 2*(7*9 + 5*7) MACs + activations / sample
        transcendentals=0,
        bytes_accessed=(9 + 5) * 4 * B + 4 * (63 + 7 + 35 + 5),
    )

    return pl.pallas_call(
        mlp_kernel,
        out_shape=jax.ShapeDtypeStruct((5, B), jnp.float32),
        grid=grid,
        in_specs=[
            pl.BlockSpec((9, tb), lambda i: (0, i)),      # activations: batch tiled on lanes
            pl.BlockSpec((7, 9), const),                  # fused weight, VMEM-resident
            pl.BlockSpec((7, 1), const),                  # fused bias
            pl.BlockSpec((5, 7), const),                  # w3
            pl.BlockSpec((5, 1), const),                  # b3
        ],
        out_specs=pl.BlockSpec((5, tb), lambda i: (0, i)),
        compiler_params=pltpu.CompilerParams(
            dimension_semantics=("parallel",),            # 2-TC sharding on v7x; loop on v5e/v6e
            vmem_limit_bytes=48 * 1024 * 1024,            # > v5e 16MiB default, < v7x 64MiB physical
        ),
        cost_estimate=cost,
    )(xT, w12, b12, w3f, b3f)


@functools.partial(jax.jit, static_argnames=("tb_max",))
def neural_network_forward(x, params, *, tb_max=65536):
    """Module-semantics forward: x (B, 9) float32 -> (B, 5) float32."""
    yT = neural_network_forward_feature_major(
        x.astype(jnp.float32).T, params, tb_max=tb_max)
    return yT.T


def init_params(key):
    """PyTorch default nn.Linear init: U(-1/sqrt(fan_in), 1/sqrt(fan_in)).
    Weights stored PyTorch-style as (out, in), biases as (out,)."""
    def linear(key, fan_in, fan_out):
        kw, kb = jax.random.split(key)
        bound = 1.0 / jnp.sqrt(jnp.float32(fan_in))
        w = jax.random.uniform(kw, (fan_out, fan_in), jnp.float32, -bound, bound)
        b = jax.random.uniform(kb, (fan_out,), jnp.float32, -bound, bound)
        return w, b

    k1, k2, k3 = jax.random.split(key, 3)
    w1, b1 = linear(k1, 9, 7)
    w2, b2 = linear(k2, 7, 7)
    w3, b3 = linear(k3, 7, 5)
    return dict(w1=w1, b1=b1, w2=w2, b2=b2, w3=w3, b3=b3)


def reference_forward(x, p):
    """Pure-JAX mirror of the PyTorch module (unfused, f32-exact dots)."""
    hi = lax.Precision.HIGHEST
    h1 = jnp.dot(x, p["w1"].T, precision=hi) + p["b1"]
    h2 = jnp.dot(h1, p["w2"].T, precision=hi) + p["b2"]
    h2 = jnp.where(h2 >= 0.0, h2, 0.2 * h2)
    h3 = jnp.dot(h2, p["w3"].T, precision=hi) + p["b3"]
    return jnp.maximum(h3, 0.0)


if __name__ == "__main__":
    key = jax.random.PRNGKey(0)
    kx, kp = jax.random.split(key)
    params = init_params(kp)

    # B=8: single sub-128 full-array block; B=200: two blocks, ragged last;
    # B=1000: 4 grid steps, ragged last block.
    for B in (8, 200, 1000):
        x = jax.random.normal(jax.random.fold_in(kx, B), (B, 9), jnp.float32)
        ref = reference_forward(x, params)

        out = jax.block_until_ready(neural_network_forward(x, params))
        assert out.shape == (B, 5), f"bad shape {out.shape} at B={B}"
        assert jnp.allclose(out, ref, atol=3e-5, rtol=3e-5), (
            f"mismatch vs reference at B={B}: "
            f"max|d|={float(jnp.max(jnp.abs(out - ref)))}")

        # Feature-major entry point (no wrapper transposes) must agree too.
        outT = jax.block_until_ready(
            neural_network_forward_feature_major(x.T, params))
        assert outT.shape == (5, B)
        assert jnp.allclose(outT.T, ref, atol=3e-5, rtol=3e-5), (
            f"feature-major mismatch at B={B}")

    print("KERNEL_OK")
</pallas_src>

<mosaic_0001>
module attributes {stable_mosaic.version = 11 : i64} {
  func.func @mlp_kernel(%arg0: i32, %arg1: memref<9x8xf32, #tpu.memory_space<vmem>>, %arg2: memref<7x9xf32, #tpu.memory_space<vmem>>, %arg3: memref<7x1xf32, #tpu.memory_space<vmem>>, %arg4: memref<5x7xf32, #tpu.memory_space<vmem>>, %arg5: memref<5x1xf32, #tpu.memory_space<vmem>>, %arg6: memref<5x8xf32, #tpu.memory_space<vmem>>) attributes {dimension_semantics = [#tpu.dimension_semantics<parallel>], iteration_bounds = array<i64: 1>, scalar_prefetch = 0 : i64, scratch_operands = 0 : i64, tpu.core_type = #tpu.core_type<tc>, window_params = [{transform_indices = @transform_0, window_bounds = array<i64: 9, 8>}, {pipeline_mode = #tpu.pipeline_mode<synchronous>, transform_indices = @transform_1, window_bounds = array<i64: 7, 9>}, {pipeline_mode = #tpu.pipeline_mode<synchronous>, transform_indices = @transform_2, window_bounds = array<i64: 7, 1>}, {pipeline_mode = #tpu.pipeline_mode<synchronous>, transform_indices = @transform_3, window_bounds = array<i64: 5, 7>}, {pipeline_mode = #tpu.pipeline_mode<synchronous>, transform_indices = @transform_4, window_bounds = array<i64: 5, 1>}, {transform_indices = @transform_5, window_bounds = array<i64: 5, 8>}]} {
    %c0 = arith.constant 0 : index
    %c0_0 = arith.constant 0 : index
    %0 = vector.load %arg1[%c0, %c0_0] : memref<9x8xf32, #tpu.memory_space<vmem>>, vector<9x8xf32>
    %c0_1 = arith.constant 0 : index
    %c0_2 = arith.constant 0 : index
    %1 = vector.load %arg2[%c0_1, %c0_2] : memref<7x9xf32, #tpu.memory_space<vmem>>, vector<7x9xf32>
    %c0_3 = arith.constant 0 : index
    %c0_4 = arith.constant 0 : index
    %2 = vector.load %arg4[%c0_3, %c0_4] : memref<5x7xf32, #tpu.memory_space<vmem>>, vector<5x7xf32>
    %c0_5 = arith.constant 0 : index
    %c0_6 = arith.constant 0 : index
    %3 = vector.load %arg3[%c0_5, %c0_6] : memref<7x1xf32, #tpu.memory_space<vmem>>, vector<7x1xf32>
    %4 = vector.shape_cast %3 : vector<7x1xf32> to vector<7x1xf32>
    %5 = vector.broadcast %4 : vector<7x1xf32> to vector<7x8xf32>
    %6 = vector.extract_strided_slice %1 {offsets = [0, 0], sizes = [7, 1], strides = [1, 1]} : vector<7x9xf32> to vector<7x1xf32>
    %7 = vector.extract_strided_slice %0 {offsets = [0, 0], sizes = [1, 8], strides = [1, 1]} : vector<9x8xf32> to vector<1x8xf32>
    %8 = vector.broadcast %6 : vector<7x1xf32> to vector<7x8xf32>
    %9 = vector.broadcast %7 : vector<1x8xf32> to vector<7x8xf32>
    %10 = arith.mulf %8, %9 : vector<7x8xf32>
    %11 = arith.addf %5, %10 : vector<7x8xf32>
    %12 = vector.extract_strided_slice %1 {offsets = [0, 1], sizes = [7, 1], strides = [1, 1]} : vector<7x9xf32> to vector<7x1xf32>
    %13 = vector.extract_strided_slice %0 {offsets = [1, 0], sizes = [1, 8], strides = [1, 1]} : vector<9x8xf32> to vector<1x8xf32>
    %14 = vector.broadcast %12 : vector<7x1xf32> to vector<7x8xf32>
    %15 = vector.broadcast %13 : vector<1x8xf32> to vector<7x8xf32>
    %16 = arith.mulf %14, %15 : vector<7x8xf32>
    %17 = arith.addf %11, %16 : vector<7x8xf32>
    %18 = vector.extract_strided_slice %1 {offsets = [0, 2], sizes = [7, 1], strides = [1, 1]} : vector<7x9xf32> to vector<7x1xf32>
    %19 = vector.extract_strided_slice %0 {offsets = [2, 0], sizes = [1, 8], strides = [1, 1]} : vector<9x8xf32> to vector<1x8xf32>
    %20 = vector.broadcast %18 : vector<7x1xf32> to vector<7x8xf32>
    %21 = vector.broadcast %19 : vector<1x8xf32> to vector<7x8xf32>
    %22 = arith.mulf %20, %21 : vector<7x8xf32>
    %23 = arith.addf %17, %22 : vector<7x8xf32>
    %24 = vector.extract_strided_slice %1 {offsets = [0, 3], sizes = [7, 1], strides = [1, 1]} : vector<7x9xf32> to vector<7x1xf32>
    %25 = vector.extract_strided_slice %0 {offsets = [3, 0], sizes = [1, 8], strides = [1, 1]} : vector<9x8xf32> to vector<1x8xf32>
    %26 = vector.broadcast %24 : vector<7x1xf32> to vector<7x8xf32>
    %27 = vector.broadcast %25 : vector<1x8xf32> to vector<7x8xf32>
    %28 = arith.mulf %26, %27 : vector<7x8xf32>
    %29 = arith.addf %23, %28 : vector<7x8xf32>
    %30 = vector.extract_strided_slice %1 {offsets = [0, 4], sizes = [7, 1], strides = [1, 1]} : vector<7x9xf32> to vector<7x1xf32>
    %31 = vector.extract_strided_slice %0 {offsets = [4, 0], sizes = [1, 8], strides = [1, 1]} : vector<9x8xf32> to vector<1x8xf32>
    %32 = vector.broadcast %30 : vector<7x1xf32> to vector<7x8xf32>
    %33 = vector.broadcast %31 : vector<1x8xf32> to vector<7x8xf32>
    %34 = arith.mulf %32, %33 : vector<7x8xf32>
    %35 = arith.addf %29, %34 : vector<7x8xf32>
    %36 = vector.extract_strided_slice %1 {offsets = [0, 5], sizes = [7, 1], strides = [1, 1]} : vector<7x9xf32> to vector<7x1xf32>
    %37 = vector.extract_strided_slice %0 {offsets = [5, 0], sizes = [1, 8], strides = [1, 1]} : vector<9x8xf32> to vector<1x8xf32>
    %38 = vector.broadcast %36 : vector<7x1xf32> to vector<7x8xf32>
    %39 = vector.broadcast %37 : vector<1x8xf32> to vector<7x8xf32>
    %40 = arith.mulf %38, %39 : vector<7x8xf32>
    %41 = arith.addf %35, %40 : vector<7x8xf32>
    %42 = vector.extract_strided_slice %1 {offsets = [0, 6], sizes = [7, 1], strides = [1, 1]} : vector<7x9xf32> to vector<7x1xf32>
    %43 = vector.extract_strided_slice %0 {offsets = [6, 0], sizes = [1, 8], strides = [1, 1]} : vector<9x8xf32> to vector<1x8xf32>
    %44 = vector.broadcast %42 : vector<7x1xf32> to vector<7x8xf32>
    %45 = vector.broadcast %43 : vector<1x8xf32> to vector<7x8xf32>
    %46 = arith.mulf %44, %45 : vector<7x8xf32>
    %47 = arith.addf %41, %46 : vector<7x8xf32>
    %48 = vector.extract_strided_slice %1 {offsets = [0, 7], sizes = [7, 1], strides = [1, 1]} : vector<7x9xf32> to vector<7x1xf32>
    %49 = vector.extract_strided_slice %0 {offsets = [7, 0], sizes = [1, 8], strides = [1, 1]} : vector<9x8xf32> to vector<1x8xf32>
    %50 = vector.broadcast %48 : vector<7x1xf32> to vector<7x8xf32>
    %51 = vector.broadcast %49 : vector<1x8xf32> to vector<7x8xf32>
    %52 = arith.mulf %50, %51 : vector<7x8xf32>
    %53 = arith.addf %47, %52 : vector<7x8xf32>
    %54 = vector.extract_strided_slice %1 {offsets = [0, 8], sizes = [7, 1], strides = [1, 1]} : vector<7x9xf32> to vector<7x1xf32>
    %55 = vector.extract_strided_slice %0 {offsets = [8, 0], sizes = [1, 8], strides = [1, 1]} : vector<9x8xf32> to vector<1x8xf32>
    %56 = vector.broadcast %54 : vector<7x1xf32> to vector<7x8xf32>
    %57 = vector.broadcast %55 : vector<1x8xf32> to vector<7x8xf32>
    %58 = arith.mulf %56, %57 : vector<7x8xf32>
    %59 = arith.addf %53, %58 : vector<7x8xf32>
    %cst = arith.constant 0.000000e+00 : f32
    %60 = vector.broadcast %cst : f32 to vector<7x8xf32>
    %61 = arith.cmpf oge, %59, %60 : vector<7x8xf32>
    %cst_7 = arith.constant 2.000000e-01 : f32
    %62 = vector.broadcast %cst_7 : f32 to vector<7x8xf32>
    %63 = arith.mulf %62, %59 : vector<7x8xf32>
    %64 = arith.select %61, %59, %63 : vector<7x8xi1>, vector<7x8xf32>
    %c0_8 = arith.constant 0 : index
    %c0_9 = arith.constant 0 : index
    %65 = vector.load %arg5[%c0_8, %c0_9] : memref<5x1xf32, #tpu.memory_space<vmem>>, vector<5x1xf32>
    %66 = vector.shape_cast %65 : vector<5x1xf32> to vector<5x1xf32>
    %67 = vector.broadcast %66 : vector<5x1xf32> to vector<5x8xf32>
    %68 = vector.extract_strided_slice %2 {offsets = [0, 0], sizes = [5, 1], strides = [1, 1]} : vector<5x7xf32> to vector<5x1xf32>
    %69 = vector.extract_strided_slice %64 {offsets = [0, 0], sizes = [1, 8], strides = [1, 1]} : vector<7x8xf32> to vector<1x8xf32>
    %70 = vector.broadcast %68 : vector<5x1xf32> to vector<5x8xf32>
    %71 = vector.broadcast %69 : vector<1x8xf32> to vector<5x8xf32>
    %72 = arith.mulf %70, %71 : vector<5x8xf32>
    %73 = arith.addf %67, %72 : vector<5x8xf32>
    %74 = vector.extract_strided_slice %2 {offsets = [0, 1], sizes = [5, 1], strides = [1, 1]} : vector<5x7xf32> to vector<5x1xf32>
    %75 = vector.extract_strided_slice %64 {offsets = [1, 0], sizes = [1, 8], strides = [1, 1]} : vector<7x8xf32> to vector<1x8xf32>
    %76 = vector.broadcast %74 : vector<5x1xf32> to vector<5x8xf32>
    %77 = vector.broadcast %75 : vector<1x8xf32> to vector<5x8xf32>
    %78 = arith.mulf %76, %77 : vector<5x8xf32>
    %79 = arith.addf %73, %78 : vector<5x8xf32>
    %80 = vector.extract_strided_slice %2 {offsets = [0, 2], sizes = [5, 1], strides = [1, 1]} : vector<5x7xf32> to vector<5x1xf32>
    %81 = vector.extract_strided_slice %64 {offsets = [2, 0], sizes = [1, 8], strides = [1, 1]} : vector<7x8xf32> to vector<1x8xf32>
    %82 = vector.broadcast %80 : vector<5x1xf32> to vector<5x8xf32>
    %83 = vector.broadcast %81 : vector<1x8xf32> to vector<5x8xf32>
    %84 = arith.mulf %82, %83 : vector<5x8xf32>
    %85 = arith.addf %79, %84 : vector<5x8xf32>
    %86 = vector.extract_strided_slice %2 {offsets = [0, 3], sizes = [5, 1], strides = [1, 1]} : vector<5x7xf32> to vector<5x1xf32>
    %87 = vector.extract_strided_slice %64 {offsets = [3, 0], sizes = [1, 8], strides = [1, 1]} : vector<7x8xf32> to vector<1x8xf32>
    %88 = vector.broadcast %86 : vector<5x1xf32> to vector<5x8xf32>
    %89 = vector.broadcast %87 : vector<1x8xf32> to vector<5x8xf32>
    %90 = arith.mulf %88, %89 : vector<5x8xf32>
    %91 = arith.addf %85, %90 : vector<5x8xf32>
    %92 = vector.extract_strided_slice %2 {offsets = [0, 4], sizes = [5, 1], strides = [1, 1]} : vector<5x7xf32> to vector<5x1xf32>
    %93 = vector.extract_strided_slice %64 {offsets = [4, 0], sizes = [1, 8], strides = [1, 1]} : vector<7x8xf32> to vector<1x8xf32>
    %94 = vector.broadcast %92 : vector<5x1xf32> to vector<5x8xf32>
    %95 = vector.broadcast %93 : vector<1x8xf32> to vector<5x8xf32>
    %96 = arith.mulf %94, %95 : vector<5x8xf32>
    %97 = arith.addf %91, %96 : vector<5x8xf32>
    %98 = vector.extract_strided_slice %2 {offsets = [0, 5], sizes = [5, 1], strides = [1, 1]} : vector<5x7xf32> to vector<5x1xf32>
    %99 = vector.extract_strided_slice %64 {offsets = [5, 0], sizes = [1, 8], strides = [1, 1]} : vector<7x8xf32> to vector<1x8xf32>
    %100 = vector.broadcast %98 : vector<5x1xf32> to vector<5x8xf32>
    %101 = vector.broadcast %99 : vector<1x8xf32> to vector<5x8xf32>
    %102 = arith.mulf %100, %101 : vector<5x8xf32>
    %103 = arith.addf %97, %102 : vector<5x8xf32>
    %104 = vector.extract_strided_slice %2 {offsets = [0, 6], sizes = [5, 1], strides = [1, 1]} : vector<5x7xf32> to vector<5x1xf32>
    %105 = vector.extract_strided_slice %64 {offsets = [6, 0], sizes = [1, 8], strides = [1, 1]} : vector<7x8xf32> to vector<1x8xf32>
    %106 = vector.broadcast %104 : vector<5x1xf32> to vector<5x8xf32>
    %107 = vector.broadcast %105 : vector<1x8xf32> to vector<5x8xf32>
    %108 = arith.mulf %106, %107 : vector<5x8xf32>
    %109 = arith.addf %103, %108 : vector<5x8xf32>
    %cst_10 = arith.constant 0.000000e+00 : f32
    %110 = vector.broadcast %cst_10 : f32 to vector<5x8xf32>
    %111 = arith.maximumf %109, %110 : vector<5x8xf32>
    %c0_11 = arith.constant 0 : index
    %c0_12 = arith.constant 0 : index
    %112 = vector.load %arg6[%c0_11, %c0_12] : memref<5x8xf32, #tpu.memory_space<vmem>>, vector<5x8xf32>
    tpu.vector_store %arg6[%c0_11, %c0_12], %111 {strides = array<i32>} : memref<5x8xf32, #tpu.memory_space<vmem>>, vector<5x8xf32>,
    return
  }
  func.func @transform_0(%arg0: i32) -> (i32, i32) {
    %c0_i32 = arith.constant 0 : i32
    %c0_i32_0 = arith.constant 0 : i32
    return %c0_i32, %arg0 : i32, i32
  }
  func.func @transform_1(%arg0: i32) -> (i32, i32) {
    %c0_i32 = arith.constant 0 : i32
    %c0_i32_0 = arith.constant 0 : i32
    %c0_i32_1 = arith.constant 0 : i32
    return %c0_i32, %c0_i32_0 : i32, i32
  }
  func.func @transform_2(%arg0: i32) -> (i32, i32) {
    %c0_i32 = arith.constant 0 : i32
    %c0_i32_0 = arith.constant 0 : i32
    %c0_i32_1 = arith.constant 0 : i32
    return %c0_i32, %c0_i32_0 : i32, i32
  }
  func.func @transform_3(%arg0: i32) -> (i32, i32) {
    %c0_i32 = arith.constant 0 : i32
    %c0_i32_0 = arith.constant 0 : i32
    %c0_i32_1 = arith.constant 0 : i32
    return %c0_i32, %c0_i32_0 : i32, i32
  }
  func.func @transform_4(%arg0: i32) -> (i32, i32) {
    %c0_i32 = arith.constant 0 : i32
    %c0_i32_0 = arith.constant 0 : i32
    %c0_i32_1 = arith.constant 0 : i32
    return %c0_i32, %c0_i32_0 : i32, i32
  }
  func.func @transform_5(%arg0: i32) -> (i32, i32) {
    %c0_i32 = arith.constant 0 : i32
    %c0_i32_0 = arith.constant 0 : i32
    return %c0_i32, %arg0 : i32, i32
  }
}

</mosaic_0001>

<llo_original>
// kernel: neural_network_forward_feature_major.1
$region0: #{neural_network_forward_feature_major.1}
  #allocation0 [shape = 'u32[]', space=smem, size = 0x4, offset = 0x4, fixed_abs, tag = 'smem constant byte address 0x4 - core index']
  #allocation1 [shape = 'u32[72,128]{1,0:T(1,128)}', space=vmem, size = 0x9000, scoped, tag = 'internal scratch']
  %s0 = inlined_call_operand.vmem [shape: f32[9,8], index: 0, kind: input, shape index: {}]
  %s1 = inlined_call_operand.vmem [shape: f32[7,9], index: 1, kind: input, shape index: {}]
  %s2 = inlined_call_operand.vmem [shape: f32[7,1], index: 2, kind: input, shape index: {}]
  %s3 = inlined_call_operand.vmem [shape: f32[5,7], index: 3, kind: input, shape index: {}]
  %s4 = inlined_call_operand.vmem [shape: f32[5,1], index: 4, kind: input, shape index: {}]
  %s5 = inlined_call_operand.hbm [shape: f32[5,8], index: 5, kind: output, shape index: {}]
  %s6 = sld [smem:[#allocation0]]
  $region30: #{neural_network_forward_feature_major.1} parent=0
    _
  %s8 = ssub.s32 1, %s6
  %s9 = scalar_select 0, %s8, %s6
  $region1: #{neural_network_forward_feature_major.1} parent=0
    #allocation2 [shape = 'u8[4096]{0}', space=vmem, size = 0x1000, scoped, tag = 'output window, operand 0, single buffered']
    #allocation3 [shape = 's32[1]{0}', space=sflag, size = 0x4, scoped, tag = 'scoped memory for neural_network_forward_feature_major.1']
    %10 = vsyncpa [#allocation3], 0
    // Predicated region
    $region2: #{neural_network_forward_feature_major.1} parent=1 // pred_check
      _
    $region3: #{neural_network_forward_feature_major.1} parent=1 // pred_check_branch
      %12 = sbr.rel (0) target = $region5
    $region4: #{neural_network_forward_feature_major.1} parent=1 // pred_region
      _
    $region5: #{neural_network_forward_feature_major.1} parent=1 // pred_fallthru
      _
    // Predicated region
    $region6: #{neural_network_forward_feature_major.1} parent=1 // pred_check
      _
    $region7: #{neural_network_forward_feature_major.1} parent=1 // pred_check_branch
      %14 = sbr.rel (0) target = $region9
    $region8: #{neural_network_forward_feature_major.1} parent=1 // pred_region
      _
    $region9: #{neural_network_forward_feature_major.1} parent=1 // pred_fallthru
      _
    // Predicated region
    $region10: #{neural_network_forward_feature_major.1} parent=1 // pred_check
      _
    $region11: #{neural_network_forward_feature_major.1} parent=1 // pred_check_branch
      %16 = sbr.rel (0) target = $region13
    $region12: #{neural_network_forward_feature_major.1} parent=1 // pred_region
      _
    $region13: #{neural_network_forward_feature_major.1} parent=1 // pred_fallthru
      _
    // Predicated region
    $region14: #{neural_network_forward_feature_major.1} parent=1 // pred_check
      _
    $region15: #{neural_network_forward_feature_major.1} parent=1 // pred_check_branch
      %18 = sbr.rel (0) target = $region17
    $region16: #{neural_network_forward_feature_major.1} parent=1 // pred_region
      _
    $region17: #{neural_network_forward_feature_major.1} parent=1 // pred_fallthru
      _
    // Predicated region
    $region18: #{neural_network_forward_feature_major.1} parent=1 // pred_check
      _
    $region19: #{neural_network_forward_feature_major.1} parent=1 // pred_check_branch
      %20 = sbr.rel (0) target = $region21
    $region20: #{neural_network_forward_feature_major.1} parent=1 // pred_region
      _
    $region21: #{neural_network_forward_feature_major.1} parent=1 // pred_fallthru
      _
    %v21 = vld [vmem:[%s0] sm:$0xff]
    %v22 = vld [vmem:[%s0 + $0x8] sm:$0x1]
    %v23 = vld [vmem:[%s1] sm:$0x7f]
    %v24 = vld [vmem:[%s3] sm:$0x1f]
    %v25 = vld [vmem:[%s2] sm:$0x7f]
    %27 = vset.pattern.permute.xlu0 0
    %28 = vperm.xlu0 %27, %v25
    %v29 = vpop.permute.xlu0 %28
    %32 = vset.pattern.permute.xlu0 0
    %33 = vperm.xlu0 %32, %v23
    %v34 = vpop.permute.xlu0 %33
    %v36 = vperm.slane %v21, 0
    %v37 = vmul.f32 %v34, %v36
    %v38 = vadd.f32 %v29, %v37
    %39 = vset.pattern.permute.xlu0 1
    %40 = vperm.xlu0 %39, %v23
    %v41 = vpop.permute.xlu0 %40
    %v43 = vperm.slane %v21, 1
    %v44 = vmul.f32 %v41, %v43
    %v45 = vadd.f32 %v38, %v44
    %46 = vset.pattern.permute.xlu0 2
    %47 = vperm.xlu0 %46, %v23
    %v48 = vpop.permute.xlu0 %47
    %v50 = vperm.slane %v21, 2
    %v51 = vmul.f32 %v48, %v50
    %v52 = vadd.f32 %v45, %v51
    %53 = vset.pattern.permute.xlu0 3
    %54 = vperm.xlu0 %53, %v23
    %v55 = vpop.permute.xlu0 %54
    %v57 = vperm.slane %v21, 3
    %v58 = vmul.f32 %v55, %v57
    %v59 = vadd.f32 %v52, %v58
    %60 = vset.pattern.permute.xlu0 4
    %61 = vperm.xlu0 %60, %v23
    %v62 = vpop.permute.xlu0 %61
    %v64 = vperm.slane %v21, 4
    %v65 = vmul.f32 %v62, %v64
    %v66 = vadd.f32 %v59, %v65
    %67 = vset.pattern.permute.xlu0 5
    %68 = vperm.xlu0 %67, %v23
    %v69 = vpop.permute.xlu0 %68
    %v71 = vperm.slane %v21, 5
    %v72 = vmul.f32 %v69, %v71
    %v73 = vadd.f32 %v66, %v72
    %74 = vset.pattern.permute.xlu0 6
    %75 = vperm.xlu0 %74, %v23
    %v76 = vpop.permute.xlu0 %75
    %v78 = vperm.slane %v21, 6
    %v79 = vmul.f32 %v76, %v78
    %v80 = vadd.f32 %v73, %v79
    %81 = vset.pattern.permute.xlu0 7
    %82 = vperm.xlu0 %81, %v23
    %v83 = vpop.permute.xlu0 %82
    %v85 = vperm.slane %v21, 7
    %v86 = vmul.f32 %v83, %v85
    %v87 = vadd.f32 %v80, %v86
    %88 = vset.pattern.permute.xlu0 8
    %89 = vperm.xlu0 %88, %v23
    %v90 = vpop.permute.xlu0 %89
    %v92 = vperm.slane %v22, 0
    %v93 = vmul.f32 %v90, %v92
    %v94 = vadd.f32 %v87, %v93
    %vm95 = vcmp.ge.f32.partialorder %v94, 0.0
    %v96 = vmul.f32 %v94, 0.2
    %v97 = vsel %vm95, %v94, %v96
    %v98 = vld [vmem:[%s4] sm:$0x1f]
    %100 = vset.pattern.permute.xlu0 0
    %101 = vperm.xlu0 %100, %v98
    %v102 = vpop.permute.xlu0 %101
    %105 = vset.pattern.permute.xlu0 0
    %106 = vperm.xlu0 %105, %v24
    %v107 = vpop.permute.xlu0 %106
    %v109 = vperm.slane %v97, 0
    %v110 = vmul.f32 %v107, %v109
    %v111 = vadd.f32 %v102, %v110
    %112 = vset.pattern.permute.xlu0 1
    %113 = vperm.xlu0 %112, %v24
    %v114 = vpop.permute.xlu0 %113
    %v116 = vperm.slane %v97, 1
    %v117 = vmul.f32 %v114, %v116
    %v118 = vadd.f32 %v111, %v117
    %119 = vset.pattern.permute.xlu0 2
    %120 = vperm.xlu0 %119, %v24
    %v121 = vpop.permute.xlu0 %120
    %v123 = vperm.slane %v97, 2
    %v124 = vmul.f32 %v121, %v123
    %v125 = vadd.f32 %v118, %v124
    %126 = vset.pattern.permute.xlu0 3
    %127 = vperm.xlu0 %126, %v24
    %v128 = vpop.permute.xlu0 %127
    %v130 = vperm.slane %v97, 3
    %v131 = vmul.f32 %v128, %v130
    %v132 = vadd.f32 %v125, %v131
    %133 = vset.pattern.permute.xlu0 4
    %134 = vperm.xlu0 %133, %v24
    %v135 = vpop.permute.xlu0 %134
    %v137 = vperm.slane %v97, 4
    %v138 = vmul.f32 %v135, %v137
    %v139 = vadd.f32 %v132, %v138
    %140 = vset.pattern.permute.xlu0 5
    %141 = vperm.xlu0 %140, %v24
    %v142 = vpop.permute.xlu0 %141
    %v144 = vperm.slane %v97, 5
    %v145 = vmul.f32 %v142, %v144
    %v146 = vadd.f32 %v139, %v145
    %147 = vset.pattern.permute.xlu0 6
    %148 = vperm.xlu0 %147, %v24
    %v149 = vpop.permute.xlu0 %148
    %v151 = vperm.slane %v97, 6
    %v152 = vmul.f32 %v149, %v151
    %v153 = vadd.f32 %v146, %v152
    %v154 = vmax.f32 %v153, 0.0
    %vm155 = vcmask 61440
    %156 = vst.msk [vmem:[#allocation2] sm:$0x1f] %vm155, %v154
    // Predicated region
    $region22: #{neural_network_forward_feature_major.1} parent=1 // pred_check
      _
    $region23: #{neural_network_forward_feature_major.1} parent=1 // pred_check_branch
      %158 = sbr.rel (0) target = $region25
    $region24: #{neural_network_forward_feature_major.1} parent=1 // pred_region
      %160 = vsyncadd [#allocation3], 0
      %s162 = sshll.u32 [#allocation2], 4
      %s163 = int_to_ptr.vmem [resolvable:$true] %s162
      %s164 = sshll.u32 %s5, 4
      %s165 = int_to_ptr.hbm [resolvable:$true] %s164
      %167 = dma.vmem_to_hbm [thread:$0]  %s163, 128, %s165, [#allocation3]
    $region25: #{neural_network_forward_feature_major.1} parent=1 // pred_fallthru
      _
    // Predicated region
    $region26: #{neural_network_forward_feature_major.1} parent=1 // pred_check
      _
    $region27: #{neural_network_forward_feature_major.1} parent=1 // pred_check_branch
      %169 = sbr.rel (0) target = $region29
    $region28: #{neural_network_forward_feature_major.1} parent=1 // pred_region
      %171 = dma.done [#allocation3], 128
    $region29: #{neural_network_forward_feature_major.1} parent=1 // pred_fallthru
      _
    %172 = vsyncpa [#allocation3], 1

</llo_original>
